<compile_context>
chip_gen: v5e
topology: v5e:2x2
jax: 0.10.0
libtpu: 0.0.40
codegen_flags: <defaults>
</compile_context>

<pallas_src>
import jax
import jax.numpy as jnp
from jax.experimental import pallas as pl
from jax.experimental.pallas import tpu as pltpu


def se_scale_kernel(x_ref, w_ref, b_ref, act_ref, o_ref):
    # x_ref:   (Cin, 1)        squeezed input vector (full, replicated per block)
    # w_ref:   (Cout_blk, Cin) 1x1 conv weights for this channel block
    # b_ref:   (Cout_blk, 1)   conv bias for this channel block
    # act_ref: (Cout_blk, HW)  activation map slice to be scaled
    # o_ref:   (Cout_blk, HW)
    # 1x1 conv == matvec over channels (MXU); no in-kernel transposes needed.
    s = jnp.dot(w_ref[...], x_ref[...],
                preferred_element_type=jnp.float32)           # (Cout_blk, 1)
    s = s + b_ref[...]                                        # (Cout_blk, 1)
    # Hardsigmoid: relu6(x + 3) / 6
    s = jnp.clip((s + 3.0) * (1.0 / 6.0), 0.0, 1.0)           # (Cout_blk, 1)
    # Broadcast-multiply per-channel scale against the spatial map.
    o_ref[...] = (s.astype(act_ref.dtype) * act_ref[...]).astype(o_ref.dtype)


def conv2d_hardsigmoid_mul(x114, w, b, x111):
    """x114: (1, Cin, 1, 1), w: (Cout, Cin, 1, 1), b: (Cout,), x111: (1, Cout, H, W)."""
    _, cin, _, _ = x114.shape
    _, cout, h, wdt = x111.shape
    hw = h * wdt

    # Wrapper-side reshapes (free on contiguous data) — no .T inside the kernel.
    x_vec = x114.reshape(cin, 1)
    w2 = w.reshape(cout, cin)
    b2 = b.reshape(cout, 1)
    act = x111.reshape(cout, hw)

    # Split channels across 2 grid points (v7x megacore); each block must keep the
    # sublane axis a multiple of 8.
    n_blk = 2 if (cout % 2 == 0 and (cout // 2) % 8 == 0) else 1
    cblk = cout // n_blk

    cost = pl.CostEstimate(
        flops=2 * cout * cin + 2 * cout * hw,
        transcendentals=0,
        bytes_accessed=4 * (cout * cin + 2 * cout * hw + cin + cout),
    )

    out = pl.pallas_call(
        se_scale_kernel,
        out_shape=jax.ShapeDtypeStruct((cout, hw), x111.dtype),
        grid=(n_blk,),
        in_specs=[
            pl.BlockSpec((cin, 1), lambda i: (0, 0)),     # x_vec (full, replicated)
            pl.BlockSpec((cblk, cin), lambda i: (i, 0)),  # weights slice
            pl.BlockSpec((cblk, 1), lambda i: (i, 0)),    # bias slice
            pl.BlockSpec((cblk, hw), lambda i: (i, 0)),   # activation slice
        ],
        out_specs=pl.BlockSpec((cblk, hw), lambda i: (i, 0)),
        compiler_params=pltpu.CompilerParams(
            dimension_semantics=("parallel",),
        ),
        cost_estimate=cost,
    )(x_vec, w2, b2, act)

    return out.reshape(1, cout, h, wdt)


def reference(x114, w, b, x111):
    cin = x114.shape[1]
    cout = x111.shape[1]
    s = (w.reshape(cout, cin) @ x114.reshape(cin, 1)) + b.reshape(cout, 1)
    s = jnp.clip((s + 3.0) / 6.0, 0.0, 1.0)
    return (s.reshape(1, cout, 1, 1) * x111).astype(x111.dtype)


if __name__ == "__main__":
    key = jax.random.PRNGKey(0)
    k1, k2, k3, k4 = jax.random.split(key, 4)

    Cin, Cout, H, W = 120, 480, 14, 14

    # Deterministic synthetic parameters (Conv2d(120, 480, kernel_size=1))
    w = jax.random.normal(k1, (Cout, Cin, 1, 1), dtype=jnp.float32) * 0.05
    b = jax.random.normal(k2, (Cout,), dtype=jnp.float32) * 0.05

    # Inputs matching the module's forward signature
    x114 = jax.random.normal(k3, (1, Cin, 1, 1), dtype=jnp.float32)
    x111 = jax.random.normal(k4, (1, Cout, H, W), dtype=jnp.float32)

    out = conv2d_hardsigmoid_mul(x114, w, b, x111)
    out = jax.block_until_ready(out)

    ref = reference(x114, w, b, x111)
    assert out.shape == (1, Cout, H, W)
    assert jnp.allclose(out, ref, atol=1e-5, rtol=1e-5)

    print("KERNEL_OK")
</pallas_src>

<mosaic_0001>
module attributes {stable_mosaic.version = 11 : i64} {
  func.func @se_scale_kernel(%arg0: i32, %arg1: memref<120x1xf32, #tpu.memory_space<vmem>>, %arg2: memref<240x120xf32, #tpu.memory_space<vmem>>, %arg3: memref<240x1xf32, #tpu.memory_space<vmem>>, %arg4: memref<240x196xf32, #tpu.memory_space<vmem>>, %arg5: memref<240x196xf32, #tpu.memory_space<vmem>>) attributes {dimension_semantics = [#tpu.dimension_semantics<parallel>], iteration_bounds = array<i64: 2>, scalar_prefetch = 0 : i64, scratch_operands = 0 : i64, tpu.core_type = #tpu.core_type<tc>, window_params = [{pipeline_mode = #tpu.pipeline_mode<synchronous>, transform_indices = @transform_0, window_bounds = array<i64: 120, 1>}, {transform_indices = @transform_1, window_bounds = array<i64: 240, 120>}, {transform_indices = @transform_2, window_bounds = array<i64: 240, 1>}, {transform_indices = @transform_3, window_bounds = array<i64: 240, 196>}, {transform_indices = @transform_4, window_bounds = array<i64: 240, 196>}]} {
    %c0 = arith.constant 0 : index
    %c0_0 = arith.constant 0 : index
    %0 = vector.load %arg2[%c0, %c0_0] : memref<240x120xf32, #tpu.memory_space<vmem>>, vector<240x120xf32>
    %c0_1 = arith.constant 0 : index
    %c0_2 = arith.constant 0 : index
    %1 = vector.load %arg1[%c0_1, %c0_2] : memref<120x1xf32, #tpu.memory_space<vmem>>, vector<120x1xf32>
    %cst = arith.constant dense<0.000000e+00> : vector<240x1xf32>
    %2 = tpu.matmul %0, %1, %cst {dimension_numbers = #tpu.dot_dimension_numbers<[1], [0], [0], [1], [0, 0, 1, 1], [], []>} : vector<240x120xf32>, vector<120x1xf32>, vector<240x1xf32> -> vector<240x1xf32>
    %c0_3 = arith.constant 0 : index
    %c0_4 = arith.constant 0 : index
    %3 = vector.load %arg3[%c0_3, %c0_4] : memref<240x1xf32, #tpu.memory_space<vmem>>, vector<240x1xf32>
    %4 = arith.addf %2, %3 : vector<240x1xf32>
    %cst_5 = arith.constant 3.000000e+00 : f32
    %5 = vector.broadcast %cst_5 : f32 to vector<240x1xf32>
    %6 = arith.addf %4, %5 : vector<240x1xf32>
    %cst_6 = arith.constant 0.166666672 : f32
    %7 = vector.broadcast %cst_6 : f32 to vector<240x1xf32>
    %8 = arith.mulf %6, %7 : vector<240x1xf32>
    %cst_7 = arith.constant 0.000000e+00 : f32
    %cst_8 = arith.constant 1.000000e+00 : f32
    %9 = vector.broadcast %cst_7 : f32 to vector<240x1xf32>
    %10 = arith.maximumf %9, %8 : vector<240x1xf32>
    %11 = vector.broadcast %cst_8 : f32 to vector<240x1xf32>
    %12 = arith.minimumf %11, %10 : vector<240x1xf32>
    %c0_9 = arith.constant 0 : index
    %c0_10 = arith.constant 0 : index
    %13 = vector.load %arg4[%c0_9, %c0_10] : memref<240x196xf32, #tpu.memory_space<vmem>>, vector<240x196xf32>
    %14 = vector.broadcast %12 : vector<240x1xf32> to vector<240x196xf32>
    %15 = arith.mulf %14, %13 : vector<240x196xf32>
    %c0_11 = arith.constant 0 : index
    %c0_12 = arith.constant 0 : index
    %16 = vector.load %arg5[%c0_11, %c0_12] : memref<240x196xf32, #tpu.memory_space<vmem>>, vector<240x196xf32>
    tpu.vector_store %arg5[%c0_11, %c0_12], %15 {strides = array<i32>} : memref<240x196xf32, #tpu.memory_space<vmem>>, vector<240x196xf32>,
    return
  }
  func.func @transform_0(%arg0: i32) -> (i32, i32) {
    %c0_i32 = arith.constant 0 : i32
    %c0_i32_0 = arith.constant 0 : i32
    %c0_i32_1 = arith.constant 0 : i32
    return %c0_i32, %c0_i32_0 : i32, i32
  }
  func.func @transform_1(%arg0: i32) -> (i32, i32) {
    %c0_i32 = arith.constant 0 : i32
    %c0_i32_0 = arith.constant 0 : i32
    return %arg0, %c0_i32 : i32, i32
  }
  func.func @transform_2(%arg0: i32) -> (i32, i32) {
    %c0_i32 = arith.constant 0 : i32
    %c0_i32_0 = arith.constant 0 : i32
    return %arg0, %c0_i32 : i32, i32
  }
  func.func @transform_3(%arg0: i32) -> (i32, i32) {
    %c0_i32 = arith.constant 0 : i32
    %c0_i32_0 = arith.constant 0 : i32
    return %arg0, %c0_i32 : i32, i32
  }
  func.func @transform_4(%arg0: i32) -> (i32, i32) {
    %c0_i32 = arith.constant 0 : i32
    %c0_i32_0 = arith.constant 0 : i32
    return %arg0, %c0_i32 : i32, i32
  }
}

</mosaic_0001>

<llo_original>
// kernel: tpu_custom_call.1
$region0: #{tpu_custom_call.1}
  #allocation0 [shape = 'u32[]', space=smem, size = 0x4, offset = 0x4, fixed_abs, tag = 'smem constant byte address 0x4 - core index']
  #allocation1 [shape = 'u32[72,128]{1,0:T(1,128)}', space=vmem, size = 0x9000, scoped, tag = 'internal scratch']
  %s0 = inlined_call_operand.vmem [shape: f32[120,1], index: 0, kind: input, shape index: {}]
  %s1 = inlined_call_operand.vmem [shape: f32[480,120], index: 1, kind: input, shape index: {}]
  %s2 = inlined_call_operand.vmem [shape: f32[480,1], index: 2, kind: input, shape index: {}]
  %s3 = inlined_call_operand.vmem [shape: f32[480,196], index: 3, kind: input, shape index: {}]
  %s4 = inlined_call_operand.vmem [shape: f32[480,196], index: 4, kind: output, shape index: {}]
  %s5 = sld [smem:[#allocation0]]
  $region49: #{tpu_custom_call.1} parent=0
    _
  %s7 = ssub.s32 1, %s5
  %s8 = scalar_select 0, %s7, %s5
  loop: start=0, step=1, limit=4
  $region2: #{tpu_custom_call.1} parent=0 // loop_pre_header
    _
  $region3: #{tpu_custom_call.1} parent=0 // loop_header
    %s10 = sphi 0, %s14
    %p11 = scmp.ge.s32.totalorder %s10, 4
    %s18 = sphi 0, %s18
    %s20 = sphi 0, %s18
    %s21 = sphi 0, %s20
    %s35 = sphi 0, %s21
    %s41 = sphi 0, %s43
    %s44 = sphi 0, %s41
    %s45 = sphi 0, %s44
    %s61 = sphi 0, %s45
    %s67 = sphi 0, %s69
    %s70 = sphi 0, %s67
    %s71 = sphi 0, %s70
    %s87 = sphi 0, %s71
    %s93 = sphi 0, %s95
    %s96 = sphi 0, %s93
    %s97 = sphi 0, %s96
    %s113 = sphi 0, %s97
    %s119 = sphi 0, %s121
    %s122 = sphi 0, %s119
    %s123 = sphi 0, %s122
    %s139 = sphi 0, %s123
  $region4: #{tpu_custom_call.1} parent=0 // loop_header_branch
    %13 = sbr.rel (%p11) target = $region8
  $region5: #{tpu_custom_call.1} parent=0 // loop_body
    %s15 = ssub.s32 %s10, 1
    %s16 = ssub.s32 %s10, 2
    %s17 = sadd.s32 %s10, 1
    %s19 = sadd.s32 %s18, 1
    %p22 = scmp.eq.s32.totalorder %s10, 1
    %p23 = scmp.ne.s32.totalorder %s18, %s20
    %p24 = scmp.eq.s32.totalorder %s10, 0
    %p25 = por %p23, %p24
    %p26 = scmp.ne.s32.totalorder %s18, %s20
    %p27 = scmp.eq.s32.totalorder %s15, 1
    %p28 = por %p26, %p27
    %p29 = scmp.ne.s32.totalorder %s20, %s21
    %p30 = scmp.eq.s32.totalorder %s15, 0
    %p31 = por %p29, %p30
    %p32 = scmp.ne.s32.totalorder %s20, %s21
    %p33 = scmp.eq.s32.totalorder %s16, 1
    %p34 = por %p32, %p33
    %p36 = scmp.ne.s32.totalorder %s21, %s35
    %p37 = scmp.eq.s32.totalorder %s16, 0
    %p38 = por %p36, %p37
    %s39 = ssub.s32 %s10, %s17
    %p40 = scmp.eq.s32.totalorder %s39, 0
    %s42 = sadd.s32 %s41, 1
    %s43 = scalar_select %p40, %s41, %s42
    %p46 = pneg %p40
    %p47 = scmp.eq.s32.totalorder %s10, 1
    %p48 = por %p46, %p47
    %p49 = scmp.ne.s32.totalorder %s41, %s44
    %p50 = scmp.eq.s32.totalorder %s10, 0
    %p51 = por %p49, %p50
    %p52 = scmp.ne.s32.totalorder %s41, %s44
    %p53 = scmp.eq.s32.totalorder %s15, 1
    %p54 = por %p52, %p53
    %p55 = scmp.ne.s32.totalorder %s44, %s45
    %p56 = scmp.eq.s32.totalorder %s15, 0
    %p57 = por %p55, %p56
    %p58 = scmp.ne.s32.totalorder %s44, %s45
    %p59 = scmp.eq.s32.totalorder %s16, 1
    %p60 = por %p58, %p59
    %p62 = scmp.ne.s32.totalorder %s45, %s61
    %p63 = scmp.eq.s32.totalorder %s16, 0
    %p64 = por %p62, %p63
    %s65 = ssub.s32 %s10, %s17
    %p66 = scmp.eq.s32.totalorder %s65, 0
    %s68 = sadd.s32 %s67, 1
    %s69 = scalar_select %p66, %s67, %s68
    %p72 = pneg %p66
    %p73 = scmp.eq.s32.totalorder %s10, 1
    %p74 = por %p72, %p73
    %p75 = scmp.ne.s32.totalorder %s67, %s70
    %p76 = scmp.eq.s32.totalorder %s10, 0
    %p77 = por %p75, %p76
    %p78 = scmp.ne.s32.totalorder %s67, %s70
    %p79 = scmp.eq.s32.totalorder %s15, 1
    %p80 = por %p78, %p79
    %p81 = scmp.ne.s32.totalorder %s70, %s71
    %p82 = scmp.eq.s32.totalorder %s15, 0
    %p83 = por %p81, %p82
    %p84 = scmp.ne.s32.totalorder %s70, %s71
    %p85 = scmp.eq.s32.totalorder %s16, 1
    %p86 = por %p84, %p85
    %p88 = scmp.ne.s32.totalorder %s71, %s87
    %p89 = scmp.eq.s32.totalorder %s16, 0
    %p90 = por %p88, %p89
    %s91 = ssub.s32 %s10, %s17
    %p92 = scmp.eq.s32.totalorder %s91, 0
    %s94 = sadd.s32 %s93, 1
    %s95 = scalar_select %p92, %s93, %s94
    %p98 = pneg %p92
    %p99 = scmp.eq.s32.totalorder %s10, 1
    %p100 = por %p98, %p99
    %p101 = scmp.ne.s32.totalorder %s93, %s96
    %p102 = scmp.eq.s32.totalorder %s10, 0
    %p103 = por %p101, %p102
    %p104 = scmp.ne.s32.totalorder %s93, %s96
    %p105 = scmp.eq.s32.totalorder %s15, 1
    %p106 = por %p104, %p105
    %p107 = scmp.ne.s32.totalorder %s96, %s97
    %p108 = scmp.eq.s32.totalorder %s15, 0
    %p109 = por %p107, %p108
    %p110 = scmp.ne.s32.totalorder %s96, %s97
    %p111 = scmp.eq.s32.totalorder %s16, 1
    %p112 = por %p110, %p111
    %p114 = scmp.ne.s32.totalorder %s97, %s113
    %p115 = scmp.eq.s32.totalorder %s16, 0
    %p116 = por %p114, %p115
    %s117 = ssub.s32 %s10, %s17
    %p118 = scmp.eq.s32.totalorder %s117, 0
    %s120 = sadd.s32 %s119, 1
    %s121 = scalar_select %p118, %s119, %s120
    %p124 = pneg %p118
    %p125 = scmp.eq.s32.totalorder %s10, 1
    %p126 = por %p124, %p125
    %p127 = scmp.ne.s32.totalorder %s119, %s122
    %p128 = scmp.eq.s32.totalorder %s10, 0
    %p129 = por %p127, %p128
    %p130 = scmp.ne.s32.totalorder %s119, %s122
    %p131 = scmp.eq.s32.totalorder %s15, 1
    %p132 = por %p130, %p131
    %p133 = scmp.ne.s32.totalorder %s122, %s123
    %p134 = scmp.eq.s32.totalorder %s15, 0
    %p135 = por %p133, %p134
    %p136 = scmp.ne.s32.totalorder %s122, %s123
    %p137 = scmp.eq.s32.totalorder %s16, 1
    %p138 = por %p136, %p137
    %p140 = scmp.ne.s32.totalorder %s123, %s139
    %p141 = scmp.eq.s32.totalorder %s16, 0
    %p142 = por %p140, %p141
    %p143 = scmp.le.s32.totalorder 1, %s10
    %p144 = scmp.lt.s32.totalorder %s10, 3
    %p145 = pnand %p143, %p144
    %p146 = pneg %p145
    // Predicated region
    $region9: #{tpu_custom_call.1} parent=5 // pred_check
      _
    $region10: #{tpu_custom_call.1} parent=5 // pred_check_branch
      %148 = sbr.rel (%p145) target = $region12
    $region11: #{tpu_custom_call.1} parent=5 // pred_region
      %s149 = ssub.s32 %s10, 1
      // Predicated region
      $region13: #{tpu_custom_call.1} parent=11 // pred_check
        %p150 = pneg %p31
      $region14: #{tpu_custom_call.1} parent=11 // pred_check_branch
        %152 = sbr.rel (%p150) target = $region16
      $region15: #{tpu_custom_call.1} parent=11 // pred_region
        _
      $region16: #{tpu_custom_call.1} parent=11 // pred_fallthru
        _
    $region12: #{tpu_custom_call.1} parent=5 // pred_fallthru
      _
    %p153 = scmp.lt.s32.totalorder %s10, 2
    // Predicated region
    $region17: #{tpu_custom_call.1} parent=5 // pred_check
      %p154 = pneg %p153
    $region18: #{tpu_custom_call.1} parent=5 // pred_check_branch
      %156 = sbr.rel (%p154) target = $region20
    $region19: #{tpu_custom_call.1} parent=5 // pred_region
      // Predicated region
      $region21: #{tpu_custom_call.1} parent=19 // pred_check
        %p157 = pneg %p51
      $region22: #{tpu_custom_call.1} parent=19 // pred_check_branch
        %159 = sbr.rel (%p157) target = $region24
      $region23: #{tpu_custom_call.1} parent=19 // pred_region
        %s160 = smul.u32 30, %s10
        %p161 = scmp.lt.s32.totalorder %s160, 59
        %s162 = scalar_select %p161, %s160, 59
        %s163 = smul.addr %s162, 8
        %s164 = scalar_lea.vmem %s1, %s163
        %s165 = smul.u32 30, %s10
      $region24: #{tpu_custom_call.1} parent=19 // pred_fallthru
        _
      // Predicated region
      $region25: #{tpu_custom_call.1} parent=19 // pred_check
        %p166 = pneg %p77
      $region26: #{tpu_custom_call.1} parent=19 // pred_check_branch
        %168 = sbr.rel (%p166) target = $region28
      $region27: #{tpu_custom_call.1} parent=19 // pred_region
        %s169 = smul.u32 30, %s10
        %p170 = scmp.lt.s32.totalorder %s169, 59
        %s171 = scalar_select %p170, %s169, 59
        %s172 = smul.addr %s171, 8
        %s173 = scalar_lea.vmem %s2, %s172
        %s174 = smul.u32 30, %s10
      $region28: #{tpu_custom_call.1} parent=19 // pred_fallthru
        _
      // Predicated region
      $region29: #{tpu_custom_call.1} parent=19 // pred_check
        %p175 = pneg %p103
      $region30: #{tpu_custom_call.1} parent=19 // pred_check_branch
        %177 = sbr.rel (%p175) target = $region32
      $region31: #{tpu_custom_call.1} parent=19 // pred_region
        %s178 = smul.u32 30, %s10
        %p179 = scmp.lt.s32.totalorder %s178, 59
        %s180 = scalar_select %p179, %s178, 59
        %s181 = smul.addr %s180, 2
        %s182 = smul.addr %s181, 8
        %s183 = scalar_lea.vmem %s3, %s182
        %s184 = smul.u32 30, %s10
      $region32: #{tpu_custom_call.1} parent=19 // pred_fallthru
        _
    $region20: #{tpu_custom_call.1} parent=5 // pred_fallthru
      _
    %p185 = scmp.le.s32.totalorder 1, %s10
    %p186 = scmp.lt.s32.totalorder %s10, 3
    %p187 = pnand %p185, %p186
    %p188 = pneg %p187
    // Predicated region
    $region33: #{tpu_custom_call.1} parent=5 // pred_check
      _
    $region34: #{tpu_custom_call.1} parent=5 // pred_check_branch
      %190 = sbr.rel (%p187) target = $region36
    $region35: #{tpu_custom_call.1} parent=5 // pred_region
      %s191 = ssub.s32 %s10, 1
      %p192 = pneg %p31
      %p193 = pneg %p28
      %s194 = smul.u32 30, %s15
      %p195 = scmp.lt.s32.totalorder %s194, 59
      %s196 = scalar_select %p195, %s194, 59
      %s197 = smul.addr %s196, 8
      %s198 = scalar_lea.vmem %s1, %s197
      %p199 = pneg %p57
      %p200 = pneg %p54
      %s201 = smul.u32 30, %s15
      %p202 = scmp.lt.s32.totalorder %s201, 59
      %s203 = scalar_select %p202, %s201, 59
      %s204 = smul.addr %s203, 8
      %s205 = scalar_lea.vmem %s2, %s204
      %p206 = pneg %p83
      %p207 = pneg %p80
      %s208 = smul.u32 30, %s15
      %p209 = scmp.lt.s32.totalorder %s208, 59
      %s210 = scalar_select %p209, %s208, 59
      %s211 = smul.addr %s210, 2
      %s212 = smul.addr %s211, 8
      %s213 = scalar_lea.vmem %s3, %s212
      %p214 = pneg %p109
      %p215 = pneg %p106
      %p216 = pneg %p135
      %p217 = pneg %p132
      %s218 = smul.u32 30, %s15
      %p219 = scmp.lt.s32.totalorder %s218, 59
      %s220 = scalar_select %p219, %s218, 59
      %s221 = smul.addr %s220, 2
      %s222 = smul.addr %s221, 8
      %s223 = scalar_lea.vmem %s4, %s222
      %s224 = smul.u32 30, %s15
      %p225 = scmp.lt.s32.totalorder %s224, 59
      %s226 = scalar_select %p225, %s224, 59
      %s227 = smul.addr %s226, 8
      %s228 = scalar_lea.vmem %s1, %s227
      %s229 = smul.u32 30, %s15
      %s230 = smul.u32 30, %s15
      %p231 = scmp.lt.s32.totalorder %s230, 59
      %s232 = scalar_select %p231, %s230, 59
      %s233 = smul.addr %s232, 8
      %s234 = scalar_lea.vmem %s2, %s233
      %s235 = smul.u32 30, %s15
      %s236 = smul.u32 30, %s15
      %p237 = scmp.lt.s32.totalorder %s236, 59
      %s238 = scalar_select %p237, %s236, 59
      %s239 = smul.addr %s238, 2
      %s240 = smul.addr %s239, 8
      %s241 = scalar_lea.vmem %s3, %s240
      %s242 = smul.u32 30, %s15
      %s243 = smul.u32 30, %s15
      %p244 = scmp.lt.s32.totalorder %s243, 59
      %s245 = scalar_select %p244, %s243, 59
      %s246 = smul.addr %s245, 2
      %s247 = smul.addr %s246, 8
      %s248 = scalar_lea.vmem %s4, %s247
      %s249 = smul.u32 30, %s15
      %v250 = vld [vmem:[%s228] sm:$0xff]
      %v251 = vld [vmem:[%s228 + $0x8] sm:$0xff]
      %v252 = vld [vmem:[%s228 + $0x10] sm:$0xff]
      %v253 = vld [vmem:[%s228 + $0x18] sm:$0xff]
      %v254 = vld [vmem:[%s228 + $0x20] sm:$0xff]
      %v255 = vld [vmem:[%s228 + $0x28] sm:$0xff]
      %v256 = vld [vmem:[%s228 + $0x30] sm:$0xff]
      %v257 = vld [vmem:[%s228 + $0x38] sm:$0xff]
      %v258 = vld [vmem:[%s228 + $0x40] sm:$0xff]
      %v259 = vld [vmem:[%s228 + $0x48] sm:$0xff]
      %v260 = vld [vmem:[%s228 + $0x50] sm:$0xff]
      %v261 = vld [vmem:[%s228 + $0x58] sm:$0xff]
      %v262 = vld [vmem:[%s228 + $0x60] sm:$0xff]
      %v263 = vld [vmem:[%s228 + $0x68] sm:$0xff]
      %v264 = vld [vmem:[%s228 + $0x70] sm:$0xff]
      %v265 = vld [vmem:[%s228 + $0x78] sm:$0xff]
      %v266 = vld [vmem:[%s228 + $0x80] sm:$0xff]
      %v267 = vld [vmem:[%s228 + $0x88] sm:$0xff]
      %v268 = vld [vmem:[%s228 + $0x90] sm:$0xff]
      %v269 = vld [vmem:[%s228 + $0x98] sm:$0xff]
      %v270 = vld [vmem:[%s228 + $0xa0] sm:$0xff]
      %v271 = vld [vmem:[%s228 + $0xa8] sm:$0xff]
      %v272 = vld [vmem:[%s228 + $0xb0] sm:$0xff]
      %v273 = vld [vmem:[%s228 + $0xb8] sm:$0xff]
      %v274 = vld [vmem:[%s228 + $0xc0] sm:$0xff]
      %v275 = vld [vmem:[%s228 + $0xc8] sm:$0xff]
      %v276 = vld [vmem:[%s228 + $0xd0] sm:$0xff]
      %v277 = vld [vmem:[%s228 + $0xd8] sm:$0xff]
      %v278 = vld [vmem:[%s228 + $0xe0] sm:$0xff]
      %v279 = vld [vmem:[%s228 + $0xe8] sm:$0xff]
      %v280 = vld [vmem:[%s0] sm:$0xff]
      %v281 = vld [vmem:[%s0 + $0x8] sm:$0xff]
      %v282 = vld [vmem:[%s0 + $0x10] sm:$0xff]
      %v283 = vld [vmem:[%s0 + $0x18] sm:$0xff]
      %v284 = vld [vmem:[%s0 + $0x20] sm:$0xff]
      %v285 = vld [vmem:[%s0 + $0x28] sm:$0xff]
      %v286 = vld [vmem:[%s0 + $0x30] sm:$0xff]
      %v287 = vld [vmem:[%s0 + $0x38] sm:$0xff]
      %v288 = vld [vmem:[%s0 + $0x40] sm:$0xff]
      %v289 = vld [vmem:[%s0 + $0x48] sm:$0xff]
      %v290 = vld [vmem:[%s0 + $0x50] sm:$0xff]
      %v291 = vld [vmem:[%s0 + $0x58] sm:$0xff]
      %v292 = vld [vmem:[%s0 + $0x60] sm:$0xff]
      %v293 = vld [vmem:[%s0 + $0x68] sm:$0xff]
      %v294 = vld [vmem:[%s0 + $0x70] sm:$0xff]
      %v295 = vld [vmem:[%s234] sm:$0xff]
      %v296 = vld [vmem:[%s234 + $0x8] sm:$0xff]
      %v297 = vld [vmem:[%s234 + $0x10] sm:$0xff]
      %v298 = vld [vmem:[%s234 + $0x18] sm:$0xff]
      %v299 = vld [vmem:[%s234 + $0x20] sm:$0xff]
      %v300 = vld [vmem:[%s234 + $0x28] sm:$0xff]
      %v301 = vld [vmem:[%s234 + $0x30] sm:$0xff]
      %v302 = vld [vmem:[%s234 + $0x38] sm:$0xff]
      %v303 = vld [vmem:[%s234 + $0x40] sm:$0xff]
      %v304 = vld [vmem:[%s234 + $0x48] sm:$0xff]
      %v305 = vld [vmem:[%s234 + $0x50] sm:$0xff]
      %v306 = vld [vmem:[%s234 + $0x58] sm:$0xff]
      %v307 = vld [vmem:[%s234 + $0x60] sm:$0xff]
      %v308 = vld [vmem:[%s234 + $0x68] sm:$0xff]
      %v309 = vld [vmem:[%s234 + $0x70] sm:$0xff]
      %v310 = vld [vmem:[%s234 + $0x78] sm:$0xff]
      %v311 = vld [vmem:[%s234 + $0x80] sm:$0xff]
      %v312 = vld [vmem:[%s234 + $0x88] sm:$0xff]
      %v313 = vld [vmem:[%s234 + $0x90] sm:$0xff]
      %v314 = vld [vmem:[%s234 + $0x98] sm:$0xff]
      %v315 = vld [vmem:[%s234 + $0xa0] sm:$0xff]
      %v316 = vld [vmem:[%s234 + $0xa8] sm:$0xff]
      %v317 = vld [vmem:[%s234 + $0xb0] sm:$0xff]
      %v318 = vld [vmem:[%s234 + $0xb8] sm:$0xff]
      %v319 = vld [vmem:[%s234 + $0xc0] sm:$0xff]
      %v320 = vld [vmem:[%s234 + $0xc8] sm:$0xff]
      %v321 = vld [vmem:[%s234 + $0xd0] sm:$0xff]
      %v322 = vld [vmem:[%s234 + $0xd8] sm:$0xff]
      %v323 = vld [vmem:[%s234 + $0xe0] sm:$0xff]
      %v324 = vld [vmem:[%s234 + $0xe8] sm:$0xff]
      %vm325 = vcmask 982016
      %v327 = vsel %vm325, %v250, 0
      %v330 = vsel %vm325, %v251, 0
      %v333 = vsel %vm325, %v252, 0
      %v336 = vsel %vm325, %v253, 0
      %v339 = vsel %vm325, %v254, 0
      %v342 = vsel %vm325, %v255, 0
      %v345 = vsel %vm325, %v256, 0
      %v348 = vsel %vm325, %v257, 0
      %v351 = vsel %vm325, %v258, 0
      %v354 = vsel %vm325, %v259, 0
      %v357 = vsel %vm325, %v260, 0
      %v360 = vsel %vm325, %v261, 0
      %v363 = vsel %vm325, %v262, 0
      %v366 = vsel %vm325, %v263, 0
      %v369 = vsel %vm325, %v264, 0
      %v372 = vsel %vm325, %v265, 0
      %v375 = vsel %vm325, %v266, 0
      %v378 = vsel %vm325, %v267, 0
      %v381 = vsel %vm325, %v268, 0
      %v384 = vsel %vm325, %v269, 0
      %v387 = vsel %vm325, %v270, 0
      %v390 = vsel %vm325, %v271, 0
      %v393 = vsel %vm325, %v272, 0
      %v396 = vsel %vm325, %v273, 0
      %v399 = vsel %vm325, %v274, 0
      %v402 = vsel %vm325, %v275, 0
      %v405 = vsel %vm325, %v276, 0
      %v408 = vsel %vm325, %v277, 0
      %v411 = vsel %vm325, %v278, 0
      %v414 = vsel %vm325, %v279, 0
      %416 = vmatpush.msra.mxu0 0.0
      %417 = vmatpush.msra.mxu0 %v294
      %418 = vmatpush.msra.mxu0 %v293
      %419 = vmatpush.msra.mxu0 %v292
      %420 = vmatpush.msra.mxu0 %v291
      %421 = vmatpush.msra.mxu0 %v290
      %422 = vmatpush.msra.mxu0 %v289
      %423 = vmatpush.msra.mxu0 %v288
      %424 = vmatpush.msra.mxu0 %v287
      %425 = vmatpush.msra.mxu0 %v286
      %426 = vmatpush.msra.mxu0 %v285
      %427 = vmatpush.msra.mxu0 %v284
      %428 = vmatpush.msra.mxu0 %v283
      %429 = vmatpush.msra.mxu0 %v282
      %430 = vmatpush.msra.mxu0 %v281
      %431 = vmatpush.msra.mxu0 %v280
      %432 = vmatmul.f32.gmra.mxu0 %v327
      %v433 = vpop.f32.mrf.mxu0
      %v434 = vadd.f32 %v295, %v433
      %435 = vmatmul.f32.gmra.mxu0 %v330
      %v436 = vpop.f32.mrf.mxu0
      %v437 = vadd.f32 %v296, %v436
      %438 = vmatmul.f32.gmra.mxu0 %v333
      %v439 = vpop.f32.mrf.mxu0
      %v440 = vadd.f32 %v297, %v439
      %441 = vmatmul.f32.gmra.mxu0 %v336
      %v442 = vpop.f32.mrf.mxu0
      %v443 = vadd.f32 %v298, %v442
      %444 = vmatmul.f32.gmra.mxu0 %v339
      %v445 = vpop.f32.mrf.mxu0
      %v446 = vadd.f32 %v299, %v445
      %447 = vmatmul.f32.gmra.mxu0 %v342
      %v448 = vpop.f32.mrf.mxu0
      %v449 = vadd.f32 %v300, %v448
      %450 = vmatmul.f32.gmra.mxu0 %v345
      %v451 = vpop.f32.mrf.mxu0
      %v452 = vadd.f32 %v301, %v451
      %453 = vmatmul.f32.gmra.mxu0 %v348
      %v454 = vpop.f32.mrf.mxu0
      %v455 = vadd.f32 %v302, %v454
      %456 = vmatmul.f32.gmra.mxu0 %v351
      %v457 = vpop.f32.mrf.mxu0
      %v458 = vadd.f32 %v303, %v457
      %459 = vmatmul.f32.gmra.mxu0 %v354
      %v460 = vpop.f32.mrf.mxu0
      %v461 = vadd.f32 %v304, %v460
      %462 = vmatmul.f32.gmra.mxu0 %v357
      %v463 = vpop.f32.mrf.mxu0
      %v464 = vadd.f32 %v305, %v463
      %465 = vmatmul.f32.gmra.mxu0 %v360
      %v466 = vpop.f32.mrf.mxu0
      %v467 = vadd.f32 %v306, %v466
      %468 = vmatmul.f32.gmra.mxu0 %v363
      %v469 = vpop.f32.mrf.mxu0
      %v470 = vadd.f32 %v307, %v469
      %471 = vmatmul.f32.gmra.mxu0 %v366
      %v472 = vpop.f32.mrf.mxu0
      %v473 = vadd.f32 %v308, %v472
      %474 = vmatmul.f32.gmra.mxu0 %v369
      %v475 = vpop.f32.mrf.mxu0
      %v476 = vadd.f32 %v309, %v475
      %477 = vmatmul.f32.gmra.mxu0 %v372
      %v478 = vpop.f32.mrf.mxu0
      %v479 = vadd.f32 %v310, %v478
      %480 = vmatmul.f32.gmra.mxu0 %v375
      %v481 = vpop.f32.mrf.mxu0
      %v482 = vadd.f32 %v311, %v481
      %483 = vmatmul.f32.gmra.mxu0 %v378
      %v484 = vpop.f32.mrf.mxu0
      %v485 = vadd.f32 %v312, %v484
      %486 = vmatmul.f32.gmra.mxu0 %v381
      %v487 = vpop.f32.mrf.mxu0
      %v488 = vadd.f32 %v313, %v487
      %489 = vmatmul.f32.gmra.mxu0 %v384
      %v490 = vpop.f32.mrf.mxu0
      %v491 = vadd.f32 %v314, %v490
      %492 = vmatmul.f32.gmra.mxu0 %v387
      %v493 = vpop.f32.mrf.mxu0
      %v494 = vadd.f32 %v315, %v493
      %495 = vmatmul.f32.gmra.mxu0 %v390
      %v496 = vpop.f32.mrf.mxu0
      %v497 = vadd.f32 %v316, %v496
      %498 = vmatmul.f32.gmra.mxu0 %v393
      %v499 = vpop.f32.mrf.mxu0
      %v500 = vadd.f32 %v317, %v499
      %501 = vmatmul.f32.gmra.mxu0 %v396
      %v502 = vpop.f32.mrf.mxu0
      %v503 = vadd.f32 %v318, %v502
      %504 = vmatmul.f32.gmra.mxu0 %v399
      %v505 = vpop.f32.mrf.mxu0
      %v506 = vadd.f32 %v319, %v505
      %507 = vmatmul.f32.gmra.mxu0 %v402
      %v508 = vpop.f32.mrf.mxu0
      %v509 = vadd.f32 %v320, %v508
      %510 = vmatmul.f32.gmra.mxu0 %v405
      %v511 = vpop.f32.mrf.mxu0
      %v512 = vadd.f32 %v321, %v511
      %513 = vmatmul.f32.gmra.mxu0 %v408
      %v514 = vpop.f32.mrf.mxu0
      %v515 = vadd.f32 %v322, %v514
      %516 = vmatmul.f32.gmra.mxu0 %v411
      %v517 = vpop.f32.mrf.mxu0
      %v518 = vadd.f32 %v323, %v517
      %519 = vmatmul.f32.gmra.mxu0 %v414
      %v520 = vpop.f32.mrf.mxu0
      %v521 = vadd.f32 %v324, %v520
      %522 = vdwg.mxu0
      %v523 = vadd.f32 %v434, 3.0
      %v524 = vadd.f32 %v437, 3.0
      %v525 = vadd.f32 %v440, 3.0
      %v526 = vadd.f32 %v443, 3.0
      %v527 = vadd.f32 %v446, 3.0
      %v528 = vadd.f32 %v449, 3.0
      %v529 = vadd.f32 %v452, 3.0
      %v530 = vadd.f32 %v455, 3.0
      %v531 = vadd.f32 %v458, 3.0
      %v532 = vadd.f32 %v461, 3.0
      %v533 = vadd.f32 %v464, 3.0
      %v534 = vadd.f32 %v467, 3.0
      %v535 = vadd.f32 %v470, 3.0
      %v536 = vadd.f32 %v473, 3.0
      %v537 = vadd.f32 %v476, 3.0
      %v538 = vadd.f32 %v479, 3.0
      %v539 = vadd.f32 %v482, 3.0
      %v540 = vadd.f32 %v485, 3.0
      %v541 = vadd.f32 %v488, 3.0
      %v542 = vadd.f32 %v491, 3.0
      %v543 = vadd.f32 %v494, 3.0
      %v544 = vadd.f32 %v497, 3.0
      %v545 = vadd.f32 %v500, 3.0
      %v546 = vadd.f32 %v503, 3.0
      %v547 = vadd.f32 %v506, 3.0
      %v548 = vadd.f32 %v509, 3.0
      %v549 = vadd.f32 %v512, 3.0
      %v550 = vadd.f32 %v515, 3.0
      %v551 = vadd.f32 %v518, 3.0
      %v552 = vadd.f32 %v521, 3.0
      %v553 = vmul.f32 %v523, 0.16666667
      %v554 = vmul.f32 %v524, 0.16666667
      %v555 = vmul.f32 %v525, 0.16666667
      %v556 = vmul.f32 %v526, 0.16666667
      %v557 = vmul.f32 %v527, 0.16666667
      %v558 = vmul.f32 %v528, 0.16666667
      %v559 = vmul.f32 %v529, 0.16666667
      %v560 = vmul.f32 %v530, 0.16666667
      %v561 = vmul.f32 %v531, 0.16666667
      %v562 = vmul.f32 %v532, 0.16666667
      %v563 = vmul.f32 %v533, 0.16666667
      %v564 = vmul.f32 %v534, 0.16666667
      %v565 = vmul.f32 %v535, 0.16666667
      %v566 = vmul.f32 %v536, 0.16666667
      %v567 = vmul.f32 %v537, 0.16666667
      %v568 = vmul.f32 %v538, 0.16666667
      %v569 = vmul.f32 %v539, 0.16666667
      %v570 = vmul.f32 %v540, 0.16666667
      %v571 = vmul.f32 %v541, 0.16666667
      %v572 = vmul.f32 %v542, 0.16666667
      %v573 = vmul.f32 %v543, 0.16666667
      %v574 = vmul.f32 %v544, 0.16666667
      %v575 = vmul.f32 %v545, 0.16666667
      %v576 = vmul.f32 %v546, 0.16666667
      %v577 = vmul.f32 %v547, 0.16666667
      %v578 = vmul.f32 %v548, 0.16666667
      %v579 = vmul.f32 %v549, 0.16666667
      %v580 = vmul.f32 %v550, 0.16666667
      %v581 = vmul.f32 %v551, 0.16666667
      %v582 = vmul.f32 %v552, 0.16666667
      %v583 = vmax.f32 %v553, 0.0
      %v584 = vmax.f32 %v554, 0.0
      %v585 = vmax.f32 %v555, 0.0
      %v586 = vmax.f32 %v556, 0.0
      %v587 = vmax.f32 %v557, 0.0
      %v588 = vmax.f32 %v558, 0.0
      %v589 = vmax.f32 %v559, 0.0
      %v590 = vmax.f32 %v560, 0.0
      %v591 = vmax.f32 %v561, 0.0
      %v592 = vmax.f32 %v562, 0.0
      %v593 = vmax.f32 %v563, 0.0
      %v594 = vmax.f32 %v564, 0.0
      %v595 = vmax.f32 %v565, 0.0
      %v596 = vmax.f32 %v566, 0.0
      %v597 = vmax.f32 %v567, 0.0
      %v598 = vmax.f32 %v568, 0.0
      %v599 = vmax.f32 %v569, 0.0
      %v600 = vmax.f32 %v570, 0.0
      %v601 = vmax.f32 %v571, 0.0
      %v602 = vmax.f32 %v572, 0.0
      %v603 = vmax.f32 %v573, 0.0
      %v604 = vmax.f32 %v574, 0.0
      %v605 = vmax.f32 %v575, 0.0
      %v606 = vmax.f32 %v576, 0.0
      %v607 = vmax.f32 %v577, 0.0
      %v608 = vmax.f32 %v578, 0.0
      %v609 = vmax.f32 %v579, 0.0
      %v610 = vmax.f32 %v580, 0.0
      %v611 = vmax.f32 %v581, 0.0
      %v612 = vmax.f32 %v582, 0.0
      %v613 = vmin.f32 %v583, 1.0
      %v614 = vmin.f32 %v584, 1.0
      %v615 = vmin.f32 %v585, 1.0
      %v616 = vmin.f32 %v586, 1.0
      %v617 = vmin.f32 %v587, 1.0
      %v618 = vmin.f32 %v588, 1.0
      %v619 = vmin.f32 %v589, 1.0
      %v620 = vmin.f32 %v590, 1.0
      %v621 = vmin.f32 %v591, 1.0
      %v622 = vmin.f32 %v592, 1.0
      %v623 = vmin.f32 %v593, 1.0
      %v624 = vmin.f32 %v594, 1.0
      %v625 = vmin.f32 %v595, 1.0
      %v626 = vmin.f32 %v596, 1.0
      %v627 = vmin.f32 %v597, 1.0
      %v628 = vmin.f32 %v598, 1.0
      %v629 = vmin.f32 %v599, 1.0
      %v630 = vmin.f32 %v600, 1.0
      %v631 = vmin.f32 %v601, 1.0
      %v632 = vmin.f32 %v602, 1.0
      %v633 = vmin.f32 %v603, 1.0
      %v634 = vmin.f32 %v604, 1.0
      %v635 = vmin.f32 %v605, 1.0
      %v636 = vmin.f32 %v606, 1.0
      %v637 = vmin.f32 %v607, 1.0
      %v638 = vmin.f32 %v608, 1.0
      %v639 = vmin.f32 %v609, 1.0
      %v640 = vmin.f32 %v610, 1.0
      %v641 = vmin.f32 %v611, 1.0
      %v642 = vmin.f32 %v612, 1.0
      %v643 = vld [vmem:[%s241] sm:$0xff]
      %v644 = vld [vmem:[%s241 + $0x8] sm:$0xff]
      %v645 = vld [vmem:[%s241 + $0x10] sm:$0xff]
      %v646 = vld [vmem:[%s241 + $0x18] sm:$0xff]
      %v647 = vld [vmem:[%s241 + $0x20] sm:$0xff]
      %v648 = vld [vmem:[%s241 + $0x28] sm:$0xff]
      %v649 = vld [vmem:[%s241 + $0x30] sm:$0xff]
      %v650 = vld [vmem:[%s241 + $0x38] sm:$0xff]
      %v651 = vld [vmem:[%s241 + $0x40] sm:$0xff]
      %v652 = vld [vmem:[%s241 + $0x48] sm:$0xff]
      %v653 = vld [vmem:[%s241 + $0x50] sm:$0xff]
      %v654 = vld [vmem:[%s241 + $0x58] sm:$0xff]
      %v655 = vld [vmem:[%s241 + $0x60] sm:$0xff]
      %v656 = vld [vmem:[%s241 + $0x68] sm:$0xff]
      %v657 = vld [vmem:[%s241 + $0x70] sm:$0xff]
      %v658 = vld [vmem:[%s241 + $0x78] sm:$0xff]
      %v659 = vld [vmem:[%s241 + $0x80] sm:$0xff]
      %v660 = vld [vmem:[%s241 + $0x88] sm:$0xff]
      %v661 = vld [vmem:[%s241 + $0x90] sm:$0xff]
      %v662 = vld [vmem:[%s241 + $0x98] sm:$0xff]
      %v663 = vld [vmem:[%s241 + $0xa0] sm:$0xff]
      %v664 = vld [vmem:[%s241 + $0xa8] sm:$0xff]
      %v665 = vld [vmem:[%s241 + $0xb0] sm:$0xff]
      %v666 = vld [vmem:[%s241 + $0xb8] sm:$0xff]
      %v667 = vld [vmem:[%s241 + $0xc0] sm:$0xff]
      %v668 = vld [vmem:[%s241 + $0xc8] sm:$0xff]
      %v669 = vld [vmem:[%s241 + $0xd0] sm:$0xff]
      %v670 = vld [vmem:[%s241 + $0xd8] sm:$0xff]
      %v671 = vld [vmem:[%s241 + $0xe0] sm:$0xff]
      %v672 = vld [vmem:[%s241 + $0xe8] sm:$0xff]
      %v673 = vld [vmem:[%s241 + $0xf0] sm:$0xff]
      %v674 = vld [vmem:[%s241 + $0xf8] sm:$0xff]
      %v675 = vld [vmem:[%s241 + $0x100] sm:$0xff]
      %v676 = vld [vmem:[%s241 + $0x108] sm:$0xff]
      %v677 = vld [vmem:[%s241 + $0x110] sm:$0xff]
      %v678 = vld [vmem:[%s241 + $0x118] sm:$0xff]
      %v679 = vld [vmem:[%s241 + $0x120] sm:$0xff]
      %v680 = vld [vmem:[%s241 + $0x128] sm:$0xff]
      %v681 = vld [vmem:[%s241 + $0x130] sm:$0xff]
      %v682 = vld [vmem:[%s241 + $0x138] sm:$0xff]
      %v683 = vld [vmem:[%s241 + $0x140] sm:$0xff]
      %v684 = vld [vmem:[%s241 + $0x148] sm:$0xff]
      %v685 = vld [vmem:[%s241 + $0x150] sm:$0xff]
      %v686 = vld [vmem:[%s241 + $0x158] sm:$0xff]
      %v687 = vld [vmem:[%s241 + $0x160] sm:$0xff]
      %v688 = vld [vmem:[%s241 + $0x168] sm:$0xff]
      %v689 = vld [vmem:[%s241 + $0x170] sm:$0xff]
      %v690 = vld [vmem:[%s241 + $0x178] sm:$0xff]
      %v691 = vld [vmem:[%s241 + $0x180] sm:$0xff]
      %v692 = vld [vmem:[%s241 + $0x188] sm:$0xff]
      %v693 = vld [vmem:[%s241 + $0x190] sm:$0xff]
      %v694 = vld [vmem:[%s241 + $0x198] sm:$0xff]
      %v695 = vld [vmem:[%s241 + $0x1a0] sm:$0xff]
      %v696 = vld [vmem:[%s241 + $0x1a8] sm:$0xff]
      %v697 = vld [vmem:[%s241 + $0x1b0] sm:$0xff]
      %v698 = vld [vmem:[%s241 + $0x1b8] sm:$0xff]
      %v699 = vld [vmem:[%s241 + $0x1c0] sm:$0xff]
      %v700 = vld [vmem:[%s241 + $0x1c8] sm:$0xff]
      %v701 = vld [vmem:[%s241 + $0x1d0] sm:$0xff]
      %v702 = vld [vmem:[%s241 + $0x1d8] sm:$0xff]
      %704 = vset.pattern.permute.xlu0 0
      %705 = vperm.xlu0 %704, %v613
      %v706 = vpop.permute.xlu0 %705
      %709 = vset.pattern.permute.xlu0 0
      %710 = vperm.xlu0 %709, %v614
      %v711 = vpop.permute.xlu0 %710
      %714 = vset.pattern.permute.xlu0 0
      %715 = vperm.xlu0 %714, %v615
      %v716 = vpop.permute.xlu0 %715
      %719 = vset.pattern.permute.xlu0 0
      %720 = vperm.xlu0 %719, %v616
      %v721 = vpop.permute.xlu0 %720
      %724 = vset.pattern.permute.xlu0 0
      %725 = vperm.xlu0 %724, %v617
      %v726 = vpop.permute.xlu0 %725
      %729 = vset.pattern.permute.xlu0 0
      %730 = vperm.xlu0 %729, %v618
      %v731 = vpop.permute.xlu0 %730
      %734 = vset.pattern.permute.xlu0 0
      %735 = vperm.xlu0 %734, %v619
      %v736 = vpop.permute.xlu0 %735
      %739 = vset.pattern.permute.xlu0 0
      %740 = vperm.xlu0 %739, %v620
      %v741 = vpop.permute.xlu0 %740
      %744 = vset.pattern.permute.xlu0 0
      %745 = vperm.xlu0 %744, %v621
      %v746 = vpop.permute.xlu0 %745
      %749 = vset.pattern.permute.xlu0 0
      %750 = vperm.xlu0 %749, %v622
      %v751 = vpop.permute.xlu0 %750
      %754 = vset.pattern.permute.xlu0 0
      %755 = vperm.xlu0 %754, %v623
      %v756 = vpop.permute.xlu0 %755
      %759 = vset.pattern.permute.xlu0 0
      %760 = vperm.xlu0 %759, %v624
      %v761 = vpop.permute.xlu0 %760
      %764 = vset.pattern.permute.xlu0 0
      %765 = vperm.xlu0 %764, %v625
      %v766 = vpop.permute.xlu0 %765
      %769 = vset.pattern.permute.xlu0 0
      %770 = vperm.xlu0 %769, %v626
      %v771 = vpop.permute.xlu0 %770
      %774 = vset.pattern.permute.xlu0 0
      %775 = vperm.xlu0 %774, %v627
      %v776 = vpop.permute.xlu0 %775
      %779 = vset.pattern.permute.xlu0 0
      %780 = vperm.xlu0 %779, %v628
      %v781 = vpop.permute.xlu0 %780
      %784 = vset.pattern.permute.xlu0 0
      %785 = vperm.xlu0 %784, %v629
      %v786 = vpop.permute.xlu0 %785
      %789 = vset.pattern.permute.xlu0 0
      %790 = vperm.xlu0 %789, %v630
      %v791 = vpop.permute.xlu0 %790
      %794 = vset.pattern.permute.xlu0 0
      %795 = vperm.xlu0 %794, %v631
      %v796 = vpop.permute.xlu0 %795
      %799 = vset.pattern.permute.xlu0 0
      %800 = vperm.xlu0 %799, %v632
      %v801 = vpop.permute.xlu0 %800
      %804 = vset.pattern.permute.xlu0 0
      %805 = vperm.xlu0 %804, %v633
      %v806 = vpop.permute.xlu0 %805
      %809 = vset.pattern.permute.xlu0 0
      %810 = vperm.xlu0 %809, %v634
      %v811 = vpop.permute.xlu0 %810
      %814 = vset.pattern.permute.xlu0 0
      %815 = vperm.xlu0 %814, %v635
      %v816 = vpop.permute.xlu0 %815
      %819 = vset.pattern.permute.xlu0 0
      %820 = vperm.xlu0 %819, %v636
      %v821 = vpop.permute.xlu0 %820
      %824 = vset.pattern.permute.xlu0 0
      %825 = vperm.xlu0 %824, %v637
      %v826 = vpop.permute.xlu0 %825
      %829 = vset.pattern.permute.xlu0 0
      %830 = vperm.xlu0 %829, %v638
      %v831 = vpop.permute.xlu0 %830
      %834 = vset.pattern.permute.xlu0 0
      %835 = vperm.xlu0 %834, %v639
      %v836 = vpop.permute.xlu0 %835
      %839 = vset.pattern.permute.xlu0 0
      %840 = vperm.xlu0 %839, %v640
      %v841 = vpop.permute.xlu0 %840
      %844 = vset.pattern.permute.xlu0 0
      %845 = vperm.xlu0 %844, %v641
      %v846 = vpop.permute.xlu0 %845
      %849 = vset.pattern.permute.xlu0 0
      %850 = vperm.xlu0 %849, %v642
      %v851 = vpop.permute.xlu0 %850
      %v853 = vmul.f32 %v706, %v643
      %v854 = vmul.f32 %v706, %v644
      %v855 = vmul.f32 %v711, %v645
      %v856 = vmul.f32 %v711, %v646
      %v857 = vmul.f32 %v716, %v647
      %v858 = vmul.f32 %v716, %v648
      %v859 = vmul.f32 %v721, %v649
      %v860 = vmul.f32 %v721, %v650
      %v861 = vmul.f32 %v726, %v651
      %v862 = vmul.f32 %v726, %v652
      %v863 = vmul.f32 %v731, %v653
      %v864 = vmul.f32 %v731, %v654
      %v865 = vmul.f32 %v736, %v655
      %v866 = vmul.f32 %v736, %v656
      %v867 = vmul.f32 %v741, %v657
      %v868 = vmul.f32 %v741, %v658
      %v869 = vmul.f32 %v746, %v659
      %v870 = vmul.f32 %v746, %v660
      %v871 = vmul.f32 %v751, %v661
      %v872 = vmul.f32 %v751, %v662
      %v873 = vmul.f32 %v756, %v663
      %v874 = vmul.f32 %v756, %v664
      %v875 = vmul.f32 %v761, %v665
      %v876 = vmul.f32 %v761, %v666
      %v877 = vmul.f32 %v766, %v667
      %v878 = vmul.f32 %v766, %v668
      %v879 = vmul.f32 %v771, %v669
      %v880 = vmul.f32 %v771, %v670
      %v881 = vmul.f32 %v776, %v671
      %v882 = vmul.f32 %v776, %v672
      %v883 = vmul.f32 %v781, %v673
      %v884 = vmul.f32 %v781, %v674
      %v885 = vmul.f32 %v786, %v675
      %v886 = vmul.f32 %v786, %v676
      %v887 = vmul.f32 %v791, %v677
      %v888 = vmul.f32 %v791, %v678
      %v889 = vmul.f32 %v796, %v679
      %v890 = vmul.f32 %v796, %v680
      %v891 = vmul.f32 %v801, %v681
      %v892 = vmul.f32 %v801, %v682
      %v893 = vmul.f32 %v806, %v683
      %v894 = vmul.f32 %v806, %v684
      %v895 = vmul.f32 %v811, %v685
      %v896 = vmul.f32 %v811, %v686
      %v897 = vmul.f32 %v816, %v687
      %v898 = vmul.f32 %v816, %v688
      %v899 = vmul.f32 %v821, %v689
      %v900 = vmul.f32 %v821, %v690
      %v901 = vmul.f32 %v826, %v691
      %v902 = vmul.f32 %v826, %v692
      %v903 = vmul.f32 %v831, %v693
      %v904 = vmul.f32 %v831, %v694
      %v905 = vmul.f32 %v836, %v695
      %v906 = vmul.f32 %v836, %v696
      %v907 = vmul.f32 %v841, %v697
      %v908 = vmul.f32 %v841, %v698
      %v909 = vmul.f32 %v846, %v699
      %v910 = vmul.f32 %v846, %v700
      %v911 = vmul.f32 %v851, %v701
      %v912 = vmul.f32 %v851, %v702
      %913 = vst [vmem:[%s248] sm:$0xff] %v853
      %vm914 = vcmask 556032
      %915 = vst.msk [vmem:[%s248 + $0x8] sm:$0xff] %vm914, %v854
      %916 = vst [vmem:[%s248 + $0x10] sm:$0xff] %v855
      %917 = vst.msk [vmem:[%s248 + $0x18] sm:$0xff] %vm914, %v856
      %918 = vst [vmem:[%s248 + $0x20] sm:$0xff] %v857
      %919 = vst.msk [vmem:[%s248 + $0x28] sm:$0xff] %vm914, %v858
      %920 = vst [vmem:[%s248 + $0x30] sm:$0xff] %v859
      %921 = vst.msk [vmem:[%s248 + $0x38] sm:$0xff] %vm914, %v860
      %922 = vst [vmem:[%s248 + $0x40] sm:$0xff] %v861
      %923 = vst.msk [vmem:[%s248 + $0x48] sm:$0xff] %vm914, %v862
      %924 = vst [vmem:[%s248 + $0x50] sm:$0xff] %v863
      %925 = vst.msk [vmem:[%s248 + $0x58] sm:$0xff] %vm914, %v864
      %926 = vst [vmem:[%s248 + $0x60] sm:$0xff] %v865
      %927 = vst.msk [vmem:[%s248 + $0x68] sm:$0xff] %vm914, %v866
      %928 = vst [vmem:[%s248 + $0x70] sm:$0xff] %v867
      %929 = vst.msk [vmem:[%s248 + $0x78] sm:$0xff] %vm914, %v868
      %930 = vst [vmem:[%s248 + $0x80] sm:$0xff] %v869
      %931 = vst.msk [vmem:[%s248 + $0x88] sm:$0xff] %vm914, %v870
      %932 = vst [vmem:[%s248 + $0x90] sm:$0xff] %v871
      %933 = vst.msk [vmem:[%s248 + $0x98] sm:$0xff] %vm914, %v872
      %934 = vst [vmem:[%s248 + $0xa0] sm:$0xff] %v873
      %935 = vst.msk [vmem:[%s248 + $0xa8] sm:$0xff] %vm914, %v874
      %936 = vst [vmem:[%s248 + $0xb0] sm:$0xff] %v875
      %937 = vst.msk [vmem:[%s248 + $0xb8] sm:$0xff] %vm914, %v876
      %938 = vst [vmem:[%s248 + $0xc0] sm:$0xff] %v877
      %939 = vst.msk [vmem:[%s248 + $0xc8] sm:$0xff] %vm914, %v878
      %940 = vst [vmem:[%s248 + $0xd0] sm:$0xff] %v879
      %941 = vst.msk [vmem:[%s248 + $0xd8] sm:$0xff] %vm914, %v880
      %942 = vst [vmem:[%s248 + $0xe0] sm:$0xff] %v881
      %943 = vst.msk [vmem:[%s248 + $0xe8] sm:$0xff] %vm914, %v882
      %944 = vst [vmem:[%s248 + $0xf0] sm:$0xff] %v883
      %945 = vst.msk [vmem:[%s248 + $0xf8] sm:$0xff] %vm914, %v884
      %946 = vst [vmem:[%s248 + $0x100] sm:$0xff] %v885
      %947 = vst.msk [vmem:[%s248 + $0x108] sm:$0xff] %vm914, %v886
      %948 = vst [vmem:[%s248 + $0x110] sm:$0xff] %v887
      %949 = vst.msk [vmem:[%s248 + $0x118] sm:$0xff] %vm914, %v888
      %950 = vst [vmem:[%s248 + $0x120] sm:$0xff] %v889
      %951 = vst.msk [vmem:[%s248 + $0x128] sm:$0xff] %vm914, %v890
      %952 = vst [vmem:[%s248 + $0x130] sm:$0xff] %v891
      %953 = vst.msk [vmem:[%s248 + $0x138] sm:$0xff] %vm914, %v892
      %954 = vst [vmem:[%s248 + $0x140] sm:$0xff] %v893
      %955 = vst.msk [vmem:[%s248 + $0x148] sm:$0xff] %vm914, %v894
      %956 = vst [vmem:[%s248 + $0x150] sm:$0xff] %v895
      %957 = vst.msk [vmem:[%s248 + $0x158] sm:$0xff] %vm914, %v896
      %958 = vst [vmem:[%s248 + $0x160] sm:$0xff] %v897
      %959 = vst.msk [vmem:[%s248 + $0x168] sm:$0xff] %vm914, %v898
      %960 = vst [vmem:[%s248 + $0x170] sm:$0xff] %v899
      %961 = vst.msk [vmem:[%s248 + $0x178] sm:$0xff] %vm914, %v900
      %962 = vst [vmem:[%s248 + $0x180] sm:$0xff] %v901
      %963 = vst.msk [vmem:[%s248 + $0x188] sm:$0xff] %vm914, %v902
      %964 = vst [vmem:[%s248 + $0x190] sm:$0xff] %v903
      %965 = vst.msk [vmem:[%s248 + $0x198] sm:$0xff] %vm914, %v904
      %966 = vst [vmem:[%s248 + $0x1a0] sm:$0xff] %v905
      %967 = vst.msk [vmem:[%s248 + $0x1a8] sm:$0xff] %vm914, %v906
      %968 = vst [vmem:[%s248 + $0x1b0] sm:$0xff] %v907
      %969 = vst.msk [vmem:[%s248 + $0x1b8] sm:$0xff] %vm914, %v908
      %970 = vst [vmem:[%s248 + $0x1c0] sm:$0xff] %v909
      %971 = vst.msk [vmem:[%s248 + $0x1c8] sm:$0xff] %vm914, %v910
      %972 = vst [vmem:[%s248 + $0x1d0] sm:$0xff] %v911
      %973 = vst.msk [vmem:[%s248 + $0x1d8] sm:$0xff] %vm914, %v912
      %s974 = smul.u32 30, %s15
      %p975 = scmp.lt.s32.totalorder %s974, 59
      %s976 = scalar_select %p975, %s974, 59
      %s977 = smul.addr %s976, 2
      %s978 = smul.addr %s977, 8
      %s979 = scalar_lea.vmem %s4, %s978
      // Predicated region
      $region37: #{tpu_custom_call.1} parent=35 // pred_check
        %p980 = pneg %p132
      $region38: #{tpu_custom_call.1} parent=35 // pred_check_branch
        %982 = sbr.rel (%p980) target = $region40
      $region39: #{tpu_custom_call.1} parent=35 // pred_region
        %s983 = smul.u32 30, %s15
      $region40: #{tpu_custom_call.1} parent=35 // pred_fallthru
        _
    $region36: #{tpu_custom_call.1} parent=5 // pred_fallthru
      _
    %p984 = scmp.le.s32.totalorder 2, %s10
    // Predicated region
    $region41: #{tpu_custom_call.1} parent=5 // pred_check
      %p985 = pneg %p984
    $region42: #{tpu_custom_call.1} parent=5 // pred_check_branch
      %987 = sbr.rel (%p985) target = $region44
    $region43: #{tpu_custom_call.1} parent=5 // pred_region
      %s988 = ssub.s32 %s10, 2
      // Predicated region
      $region45: #{tpu_custom_call.1} parent=43 // pred_check
        %p989 = pneg %p138
      $region46: #{tpu_custom_call.1} parent=43 // pred_check_branch
        %991 = sbr.rel (%p989) target = $region48
      $region47: #{tpu_custom_call.1} parent=43 // pred_region
        %s992 = smul.u32 30, %s16
        %p993 = scmp.lt.s32.totalorder %s992, 59
        %s994 = scalar_select %p993, %s992, 59
        %s995 = smul.addr %s994, 2
        %s996 = smul.addr %s995, 8
        %s997 = scalar_lea.vmem %s4, %s996
      $region48: #{tpu_custom_call.1} parent=43 // pred_fallthru
        _
    $region44: #{tpu_custom_call.1} parent=5 // pred_fallthru
      _
  $region6: #{tpu_custom_call.1} parent=0 // loop_footer
    %s14 = sadd.s32 1, %s10
  $region7: #{tpu_custom_call.1} parent=0 // loop_footer_branch
    %9 = sbr.rel target = $region3
  $region8: #{tpu_custom_call.1} parent=0 // loop_exit
    _

</llo_original>
